<compile_context>
chip_gen: v7x
topology: tpu7x:2x2x1
jax: 0.10.0
libtpu: 0.0.40
codegen_flags: <defaults>
</compile_context>

<pallas_src>
import jax
import jax.numpy as jnp
from jax.experimental import pallas as pl
from jax.experimental.pallas import tpu as pltpu


def _vmem_limit_bytes():
    try:
        cap = pltpu.get_tpu_info().vmem_capacity_bytes
        return int(cap) // 2              # 64 MiB on v5e/v6e, 32 MiB on v7x
    except Exception:
        return 32 * 1024 * 1024           # safe fallback on every generation


_VMEM_LIMIT = _vmem_limit_bytes()
_SCAN_TC = 8                               # inner time-chunk (one sublane slab)


def _round_up(x, m):
    return (x + m - 1) // m * m


def _pick_tile(dim, candidates):
    for c in candidates:
        if dim % c == 0:
            return c
    return dim


# ----------------------------------------------------------------------------
# Tiled MXU matmul (bf16 operands, f32 accumulation, optional fused epilogue)
# ----------------------------------------------------------------------------
def _build_matmul_kernel(has_bias, has_res, activation, use_acc):
    has_epilogue = has_bias or has_res or (activation is not None)

    def kernel(*refs):
        i = 0
        a_ref = refs[i]; i += 1
        b_ref = refs[i]; i += 1
        bias_ref = None
        res_ref = None
        if has_bias:
            bias_ref = refs[i]; i += 1
        if has_res:
            res_ref = refs[i]; i += 1
        o_ref = refs[i]; i += 1
        acc_ref = refs[i] if use_acc else o_ref   # f32 out: accumulate in-place

        @pl.when(pl.program_id(2) == 0)
        def _():
            acc_ref[...] = jnp.zeros_like(acc_ref)

        acc_ref[...] += jnp.dot(a_ref[...], b_ref[...],
                                preferred_element_type=jnp.float32)

        if has_epilogue or use_acc:
            @pl.when(pl.program_id(2) == pl.num_programs(2) - 1)
            def _():
                r = acc_ref[...]
                if has_bias:
                    r = r + bias_ref[...]
                if activation is not None:
                    r = activation(r)
                if has_res:
                    r = r + res_ref[...]
                o_ref[...] = r.astype(o_ref.dtype)

    return kernel


def pallas_matmul(a, b, bias=None, residual=None, activation=None,
                  out_dtype=jnp.float32):
    """(M, K) @ (K, N) -> (M, N).  bf16 MXU operands, f32 accumulation.

    Optional fused epilogue applied on the last K step:
        out = activation(acc + bias) + residual
    """
    M, K = a.shape
    K2, N = b.shape
    assert K == K2
    a = a.astype(jnp.bfloat16)          # no-op when upstream already emits bf16
    b = b.astype(jnp.bfloat16)          # no-op: weights are bf16 at init

    Mp = _round_up(M, 8)
    Kp = _round_up(K, 128)
    Np = _round_up(N, 128)
    tm = _pick_tile(Mp, (512, 256, 128, 64, 32, 16, 8))
    tk = _pick_tile(Kp, (512, 256, 128))
    tn = _pick_tile(Np, (256, 128))

    if (Mp, Kp) != (M, K):
        a = jnp.pad(a, ((0, Mp - M), (0, Kp - K)))
    if (Kp, Np) != (K, N):              # never triggers at real dims (init pad)
        b = jnp.pad(b, ((0, Kp - K), (0, Np - N)))

    has_bias = bias is not None
    has_res = residual is not None

    inputs = [a, b]
    in_specs = [pl.BlockSpec((tm, tk), lambda i, j, k: (i, k)),
                pl.BlockSpec((tk, tn), lambda i, j, k: (k, j))]
    if has_bias:
        bias = bias.reshape(1, -1).astype(jnp.float32)
        if bias.shape[1] != Np:
            bias = jnp.pad(bias, ((0, 0), (0, Np - bias.shape[1])))
        inputs.append(bias)
        in_specs.append(pl.BlockSpec((1, tn), lambda i, j, k: (0, j)))
    if has_res:
        residual = residual.astype(jnp.float32)
        rm, rn = residual.shape
        if (rm, rn) != (Mp, Np):
            residual = jnp.pad(residual, ((0, Mp - rm), (0, Np - rn)))
        inputs.append(residual)
        in_specs.append(pl.BlockSpec((tm, tn), lambda i, j, k: (i, j)))

    use_acc = (out_dtype != jnp.float32)
    kernel = _build_matmul_kernel(has_bias, has_res, activation, use_acc)

    out = pl.pallas_call(
        kernel,
        out_shape=jax.ShapeDtypeStruct((Mp, Np), out_dtype),
        grid=(Mp // tm, Np // tn, Kp // tk),
        in_specs=in_specs,
        out_specs=pl.BlockSpec((tm, tn), lambda i, j, k: (i, j)),
        scratch_shapes=([pltpu.VMEM((tm, tn), jnp.float32)] if use_acc else []),
        compiler_params=pltpu.CompilerParams(
            dimension_semantics=("parallel", "parallel", "arbitrary"),
            vmem_limit_bytes=_VMEM_LIMIT),
    )(*inputs)
    if (Mp, Np) != (M, N):
        out = out[:M, :N]
    return out


# ----------------------------------------------------------------------------
# RMSNorm (row-tiled, parallel, bf16 output)
# ----------------------------------------------------------------------------
def _rmsnorm_kernel(x_ref, w_ref, o_ref):
    x = x_ref[...].astype(jnp.float32)
    var = jnp.mean(x * x, axis=-1, keepdims=True)
    o_ref[...] = (x * jax.lax.rsqrt(var + 1e-5) * w_ref[...]).astype(o_ref.dtype)


def pallas_rmsnorm(x, w, out_dtype=jnp.bfloat16):
    """x: (M, D), w: (D,) -> (M, D) in out_dtype."""
    M, D = x.shape
    Mp = _round_up(M, 8)
    tm = _pick_tile(Mp, (512, 256, 128, 64, 32, 16, 8))
    if Mp != M:
        x = jnp.pad(x, ((0, Mp - M), (0, 0)))
    out = pl.pallas_call(
        _rmsnorm_kernel,
        out_shape=jax.ShapeDtypeStruct((Mp, D), out_dtype),
        grid=(Mp // tm,),
        in_specs=[pl.BlockSpec((tm, D), lambda i: (i, 0)),
                  pl.BlockSpec((1, D), lambda i: (0, 0))],
        out_specs=pl.BlockSpec((tm, D), lambda i: (i, 0)),
        compiler_params=pltpu.CompilerParams(
            dimension_semantics=("parallel",),
            vmem_limit_bytes=_VMEM_LIMIT),
    )(x, w.reshape(1, D).astype(jnp.float32))
    return out[:M] if Mp != M else out


# ----------------------------------------------------------------------------
# Causal depthwise conv1d + SiLU (batch & channel parallel, bf16 in/out)
# ----------------------------------------------------------------------------
def _causal_conv_silu_kernel(xpad_ref, w_ref, b_ref, o_ref):
    # xpad: (L+K-1, Ct)  w: (K, Ct)  b: (1, Ct)  o: (L, Ct)
    L, C = o_ref.shape
    K = w_ref.shape[0]
    acc = jnp.zeros((L, C), jnp.float32)
    for k in range(K):                      # static unroll over tiny conv taps
        acc = acc + w_ref[pl.ds(k, 1), :] * xpad_ref[pl.ds(k, L), :].astype(jnp.float32)
    acc = acc + b_ref[...]
    o_ref[...] = (acc * jax.nn.sigmoid(acc)).astype(o_ref.dtype)   # SiLU


def causal_conv_silu(x, w, b):
    """Depthwise causal conv1d (kernel K) + SiLU.  x: (B, L, C) -> bf16."""
    Bn, L, C = x.shape
    K = w.shape[0]
    xpad = jnp.pad(x.astype(jnp.bfloat16), ((0, 0), (K - 1, 0), (0, 0)))
    tc = 256 if (C % 256 == 0) else C       # 256 keeps v7x VMEM headroom
    return pl.pallas_call(
        _causal_conv_silu_kernel,
        out_shape=jax.ShapeDtypeStruct((Bn, L, C), jnp.bfloat16),
        grid=(Bn, C // tc),
        in_specs=[pl.BlockSpec((None, L + K - 1, tc), lambda i, j: (i, 0, j)),
                  pl.BlockSpec((K, tc), lambda i, j: (0, j)),
                  pl.BlockSpec((1, tc), lambda i, j: (0, j))],
        out_specs=pl.BlockSpec((None, L, tc), lambda i, j: (i, 0, j)),
        compiler_params=pltpu.CompilerParams(
            dimension_semantics=("parallel", "parallel"),
            vmem_limit_bytes=_VMEM_LIMIT),
    )(xpad, w.astype(jnp.float32), b.reshape(1, C).astype(jnp.float32))


# ----------------------------------------------------------------------------
# Selective state-space scan
#   * L-chunked ("arbitrary" innermost axis), h persisted in VMEM scratch
#   * batch and Din tiles are "parallel" grid axes (megacore sharding)
#   * per-step (N, td) temporaries only — no (TC, N, Din) materialization
#   * bu = dt*x⊗B computed in-kernel from VMEM tiles; SiLU gate fused
# ----------------------------------------------------------------------------
def _selective_scan_kernel(dt_ref, x_ref, b_ref, c_ref, z_ref, a_ref, d_ref,
                           y_ref, h_ref):
    # blocks per (batch, din-tile, L-chunk):
    #   dt, x, z, y : (LC, td)   b, c : (LC, N)   a : (N, td)   d : (1, td)
    # h_ref scratch: (N, td) — SSM state, persists across L-chunks.
    @pl.when(pl.program_id(2) == 0)
    def _():
        h_ref[...] = jnp.zeros_like(h_ref)

    A = a_ref[...]                                     # (N, td) f32
    d_row = d_ref[...]                                 # (1, td) f32
    LC = dt_ref.shape[0]
    TC = _SCAN_TC
    n_inner = LC // TC

    def inner(i, h):
        s = pl.multiple_of(i * TC, TC)
        dt_c = dt_ref[pl.ds(s, TC), :]                           # (TC, td) f32
        x_c = x_ref[pl.ds(s, TC), :].astype(jnp.float32)         # (TC, td)
        z_c = z_ref[pl.ds(s, TC), :].astype(jnp.float32)         # (TC, td)
        b_ct = b_ref[pl.ds(s, TC), :].astype(jnp.float32).T      # (N, TC)
        c_ct = c_ref[pl.ds(s, TC), :].astype(jnp.float32).T      # (N, TC)
        dtx = dt_c * x_c                                         # (TC, td)

        ys = []
        for t in range(TC):          # unrolled; per-step temps are (N, td)
            dA_t = jnp.exp(dt_c[t:t + 1, :] * A)                 # (N, td)
            bu_t = dtx[t:t + 1, :] * b_ct[:, t:t + 1]            # (N, td)
            h = dA_t * h + bu_t
            ys.append(jnp.sum(c_ct[:, t:t + 1] * h, axis=0,
                              keepdims=True))                    # (1, td)
        y = jnp.concatenate(ys, axis=0)                          # (TC, td)
        y = y + d_row * x_c
        y = y * (z_c * jax.nn.sigmoid(z_c))                      # fused SiLU gate
        y_ref[pl.ds(s, TC), :] = y.astype(y_ref.dtype)           # full slab store
        return h

    h_ref[...] = jax.lax.fori_loop(0, n_inner, inner, h_ref[...])


def selective_scan(dt, x, bm, cm, z, a_t, d_vec):
    """dt: (B,L,Din) f32.  x,z: (B,L,Din).  bm,cm: (B,L,N).
       a_t: (N,Din) f32.  d_vec: (Din,) f32.  Returns (B,L,Din) bf16."""
    Bn, L, Din = x.shape
    N = bm.shape[-1]
    if L >= 256:
        LC = 256
    elif L >= 128:
        LC = 128
    else:
        LC = _round_up(L, _SCAN_TC)
    Lp = _round_up(L, LC)
    td = Din
    for c in (512, 256, 128):
        if Din % c == 0:
            td = c
            break

    def pad_l(t):
        return t if Lp == L else jnp.pad(t, ((0, 0), (0, Lp - L), (0, 0)))

    dt_p = pad_l(dt.astype(jnp.float32))       # dt stays f32 (feeds exp)
    x_p = pad_l(x.astype(jnp.bfloat16))
    z_p = pad_l(z.astype(jnp.bfloat16))
    b_p = pad_l(bm.astype(jnp.bfloat16))
    c_p = pad_l(cm.astype(jnp.bfloat16))

    out = pl.pallas_call(
        _selective_scan_kernel,
        out_shape=jax.ShapeDtypeStruct((Bn, Lp, Din), jnp.bfloat16),
        grid=(Bn, Din // td, Lp // LC),
        in_specs=[pl.BlockSpec((None, LC, td), lambda b, d, l: (b, l, d)),
                  pl.BlockSpec((None, LC, td), lambda b, d, l: (b, l, d)),
                  pl.BlockSpec((None, LC, N), lambda b, d, l: (b, l, 0)),
                  pl.BlockSpec((None, LC, N), lambda b, d, l: (b, l, 0)),
                  pl.BlockSpec((None, LC, td), lambda b, d, l: (b, l, d)),
                  pl.BlockSpec((N, td), lambda b, d, l: (0, d)),
                  pl.BlockSpec((1, td), lambda b, d, l: (0, d))],
        out_specs=pl.BlockSpec((None, LC, td), lambda b, d, l: (b, l, d)),
        scratch_shapes=[pltpu.VMEM((N, td), jnp.float32)],
        compiler_params=pltpu.CompilerParams(
            dimension_semantics=("parallel", "parallel", "arbitrary"),
            vmem_limit_bytes=_VMEM_LIMIT),
    )(dt_p, x_p, b_p, c_p, z_p, a_t.astype(jnp.float32),
      d_vec.reshape(1, Din).astype(jnp.float32))
    return out[:, :L, :] if Lp != L else out


# ----------------------------------------------------------------------------
# Parameters (deterministic init; weights bf16 + lane-dense padded at init)
# ----------------------------------------------------------------------------
def _prep_weight(w):
    """Pad weight N to a 128-multiple and cast to bf16 ONCE at init."""
    K, N = w.shape
    Np = _round_up(N, 128)
    if Np != N:
        w = jnp.pad(w, ((0, 0), (0, Np - N)))
    return w.astype(jnp.bfloat16)


def init_params(key, vocab, d_model, n_layers, d_inner, d_state, dt_rank,
                d_conv):
    keys = jax.random.split(key, 2 + n_layers)
    emb = jax.random.normal(keys[0], (vocab, d_model), jnp.float32) * 0.02
    np_x = _round_up(dt_rank + 2 * d_state, 128)      # x_proj output width
    d_inner_pad = _round_up(d_inner, 128)
    params = {
        "emb": emb,
        "lm_head": _prep_weight(emb.T),               # pre-transposed, bf16, padded
        "norm_f": jnp.ones((d_model,), jnp.float32),
        "vocab": vocab,
        "layers": [],
    }
    for li in range(n_layers):
        k = jax.random.split(keys[2 + li], 6)
        a_log = jnp.log(jnp.tile(
            jnp.arange(1, d_state + 1, dtype=jnp.float32)[None, :],
            (d_inner, 1)))
        # x_proj columns: [dt (dt_rank) | B (d_state) | C (d_state) | zero pad]
        xproj_raw = jax.random.normal(k[2], (d_inner, dt_rank + 2 * d_state)) * 0.02
        xproj = jnp.zeros((d_inner, np_x), jnp.float32)
        xproj = xproj.at[:, :dt_rank + 2 * d_state].set(xproj_raw)
        # dt_proj K padded to np_x with zero rows, so xdbl can be fed whole
        # (B/C/pad columns hit zero weight rows and contribute nothing).
        dtw_raw = jax.random.normal(k[3], (dt_rank, d_inner)) * 0.1
        dtw = jnp.zeros((np_x, d_inner), jnp.float32).at[:dt_rank].set(dtw_raw)
        params["layers"].append({
            "d_inner": d_inner,
            "dt_rank": dt_rank,
            "norm": jnp.ones((d_model,), jnp.float32),
            "in_proj": _prep_weight(
                jax.random.normal(k[0], (d_model, 2 * d_inner)) * 0.02),
            "conv_w": (jax.random.normal(k[1], (d_conv, d_inner)) * 0.1),
            "conv_b": jnp.zeros((d_inner,), jnp.float32),
            "x_proj": _prep_weight(xproj),
            "dt_proj_w": _prep_weight(dtw),
            "dt_proj_b": jnp.pad(jnp.full((d_inner,), -2.0, jnp.float32),
                                 (0, d_inner_pad - d_inner)),
            "A_log": a_log,                            # (d_inner, d_state)
            "D": jnp.ones((d_inner,), jnp.float32),
            "out_proj": _prep_weight(
                jax.random.normal(k[4], (d_inner, d_model)) * 0.02),
        })
    return params


# ----------------------------------------------------------------------------
# Forward pass (Baseline.forward -> backbone(input_ids, attention_mask, ...))
# ----------------------------------------------------------------------------
def baseline_forward(params, full_ids, full_mask, full_loss_mask=None):
    del full_loss_mask  # not consumed by MambaForCausalLM (see TODO above)
    Bn, L = full_ids.shape
    d_model = params["emb"].shape[1]
    M = Bn * L

    h = jnp.take(params["emb"], full_ids, axis=0).astype(jnp.float32)
    h = h * full_mask[..., None].astype(h.dtype)            # mask padded tokens

    for layer in params["layers"]:
        d_inner = layer["d_inner"]
        dt_rank = layer["dt_rank"]
        d_state = layer["A_log"].shape[1]

        res2d = h.reshape(M, d_model)                        # f32 residual
        xn = pallas_rmsnorm(res2d, layer["norm"])            # bf16

        xz = pallas_matmul(xn, layer["in_proj"],
                           out_dtype=jnp.bfloat16)           # (M, 2*d_inner) bf16
        x_c = xz[:, :d_inner].reshape(Bn, L, d_inner)
        z = xz[:, d_inner:2 * d_inner].reshape(Bn, L, d_inner)

        x_conv = causal_conv_silu(x_c, layer["conv_w"], layer["conv_b"])  # bf16

        xdbl = pallas_matmul(x_conv.reshape(M, d_inner), layer["x_proj"],
                             out_dtype=jnp.bfloat16)         # (M, np_x) bf16
        Bm = xdbl[:, dt_rank:dt_rank + d_state].reshape(Bn, L, d_state)
        Cm = xdbl[:, dt_rank + d_state:dt_rank + 2 * d_state].reshape(
            Bn, L, d_state)

        # dt_proj + bias + softplus fused into the matmul epilogue (f32 out).
        dt = pallas_matmul(xdbl, layer["dt_proj_w"], bias=layer["dt_proj_b"],
                           activation=jax.nn.softplus, out_dtype=jnp.float32)
        dt = dt[:, :d_inner].reshape(Bn, L, d_inner)

        A = -jnp.exp(layer["A_log"])                         # (d_inner, d_state)
        # bu = dt*x*B is computed inside the scan kernel (no HBM blowup).
        y = selective_scan(dt, x_conv, Bm, Cm, z, A.T, layer["D"])  # bf16

        # out_proj + residual add fused into the matmul epilogue (f32 out).
        hn = pallas_matmul(y.reshape(M, d_inner), layer["out_proj"],
                           residual=res2d, out_dtype=jnp.float32)
        h = hn[:, :d_model].reshape(Bn, L, d_model)

    hf = pallas_rmsnorm(h.reshape(M, d_model), params["norm_f"])
    logits = pallas_matmul(hf, params["lm_head"], out_dtype=jnp.float32)
    vocab = params["vocab"]
    return logits[:, :vocab].reshape(Bn, L, vocab)


# ----------------------------------------------------------------------------
if __name__ == "__main__":
    key = jax.random.PRNGKey(0)

    # small synthetic config (real mamba-130m: d_model=768, 24 layers, vocab≈50k)
    Bn, L = 2, 8
    vocab, d_model, n_layers = 64, 32, 2
    d_state, d_conv, expand = 8, 4, 2
    d_inner = expand * d_model
    dt_rank = max(1, d_model // 16)

    params = init_params(key, vocab, d_model, n_layers, d_inner, d_state,
                         dt_rank, d_conv)

    kid = jax.random.fold_in(key, 1)
    full_ids = jax.random.randint(kid, (Bn, L), 0, vocab, dtype=jnp.int32)
    full_mask = jnp.ones((Bn, L), jnp.float32)
    full_loss_mask = jnp.ones((Bn, L), jnp.float32)

    logits = baseline_forward(params, full_ids, full_mask, full_loss_mask)
    logits = jax.block_until_ready(logits)

    assert logits.shape == (Bn, L, vocab), logits.shape
    assert bool(jnp.all(jnp.isfinite(logits)))
    print("KERNEL_OK")
</pallas_src>

<mosaic_0001>
module attributes {stable_mosaic.version = 11 : i64} {
  func.func @_rmsnorm_kernel(%arg0: i32, %arg1: memref<16x32xf32, #tpu.memory_space<vmem>>, %arg2: memref<1x32xf32, #tpu.memory_space<vmem>>, %arg3: memref<16x32xbf16, #tpu.memory_space<vmem>>) attributes {dimension_semantics = [#tpu.dimension_semantics<parallel>], iteration_bounds = array<i64: 1>, scalar_prefetch = 0 : i64, scratch_operands = 0 : i64, tpu.core_type = #tpu.core_type<tc>, window_params = [{transform_indices = @transform_0, window_bounds = array<i64: 16, 32>}, {pipeline_mode = #tpu.pipeline_mode<synchronous>, transform_indices = @transform_1, window_bounds = array<i64: 1, 32>}, {transform_indices = @transform_2, window_bounds = array<i64: 16, 32>}]} {
    %c0 = arith.constant 0 : index
    %c0_0 = arith.constant 0 : index
    %0 = vector.load %arg1[%c0, %c0_0] : memref<16x32xf32, #tpu.memory_space<vmem>>, vector<16x32xf32>
    %1 = arith.mulf %0, %0 : vector<16x32xf32>
    %cst = arith.constant dense<0.000000e+00> : vector<16xf32>
    %2 = vector.multi_reduction <add>, %1, %cst [1] : vector<16x32xf32> to vector<16xf32>
    %3 = vector.shape_cast %2 : vector<16xf32> to vector<16x1xf32>
    %cst_1 = arith.constant 3.200000e+01 : f32
    %4 = vector.broadcast %cst_1 : f32 to vector<16x1xf32>
    %5 = arith.divf %3, %4 : vector<16x1xf32>
    %cst_2 = arith.constant 9.99999974E-6 : f32
    %6 = vector.broadcast %cst_2 : f32 to vector<16x1xf32>
    %7 = arith.addf %5, %6 : vector<16x1xf32>
    %8 = math.rsqrt %7 : vector<16x1xf32>
    %9 = vector.broadcast %8 : vector<16x1xf32> to vector<16x32xf32>
    %10 = arith.mulf %0, %9 : vector<16x32xf32>
    %c0_3 = arith.constant 0 : index
    %c0_4 = arith.constant 0 : index
    %11 = vector.load %arg2[%c0_3, %c0_4] : memref<1x32xf32, #tpu.memory_space<vmem>>, vector<1x32xf32>
    %12 = vector.broadcast %11 : vector<1x32xf32> to vector<16x32xf32>
    %13 = arith.mulf %10, %12 : vector<16x32xf32>
    %14 = arith.truncf %13 : vector<16x32xf32> to vector<16x32xbf16>
    %c0_5 = arith.constant 0 : index
    %c0_6 = arith.constant 0 : index
    %15 = vector.load %arg3[%c0_5, %c0_6] : memref<16x32xbf16, #tpu.memory_space<vmem>>, vector<16x32xbf16>
    tpu.vector_store %arg3[%c0_5, %c0_6], %14 {strides = array<i32>} : memref<16x32xbf16, #tpu.memory_space<vmem>>, vector<16x32xbf16>,
    return
  }
  func.func @transform_0(%arg0: i32) -> (i32, i32) {
    %c0_i32 = arith.constant 0 : i32
    %c0_i32_0 = arith.constant 0 : i32
    return %arg0, %c0_i32 : i32, i32
  }
  func.func @transform_1(%arg0: i32) -> (i32, i32) {
    %c0_i32 = arith.constant 0 : i32
    %c0_i32_0 = arith.constant 0 : i32
    %c0_i32_1 = arith.constant 0 : i32
    return %c0_i32, %c0_i32_0 : i32, i32
  }
  func.func @transform_2(%arg0: i32) -> (i32, i32) {
    %c0_i32 = arith.constant 0 : i32
    %c0_i32_0 = arith.constant 0 : i32
    return %arg0, %c0_i32 : i32, i32
  }
}

</mosaic_0001>

<llo_original>
// kernel: tpu_custom_call.1
$region0: #{tpu_custom_call.1}
  #allocation0 [shape = 'u32[]', space=smem, size = 0x4, offset = 0x4, fixed_abs, tag = 'smem constant byte address 0x4 - core index']
  #allocation1 [shape = 'u32[144,128]{1,0:T(1,128)}', space=vmem, size = 0x12000, scoped, tag = 'internal scratch']
  %s0 = inlined_call_operand.hbm [shape: f32[16,32], index: 0, kind: input, shape index: {}]
  %s1 = inlined_call_operand.vmem [shape: f32[1,32], index: 1, kind: input, shape index: {}]
  %s2 = inlined_call_operand.hbm [shape: bf16[16,32], index: 2, kind: output, shape index: {}]
  %s3 = sld [smem:[#allocation0]]
  $region22: #{tpu_custom_call.1} parent=0
    _
  %s5 = ssub.s32 1, %s3
  %s6 = scalar_select 0, %s5, %s3
  $region1: #{tpu_custom_call.1} parent=0
    #allocation2 [shape = 'u8[8192]{0}', space=vmem, size = 0x2000, scoped, tag = 'input window, operand 0, single buffered']
    #allocation3 [shape = 's32[1]{0}', space=sflag, size = 0x4, scoped, tag = 'scoped memory for tpu_custom_call.1']
    #allocation4 [shape = 's32[1]{0}', space=sflag, size = 0x4, scoped, tag = 'scoped memory for tpu_custom_call.1']
    #allocation5 [shape = 'u8[4096]{0}', space=vmem, size = 0x1000, scoped, tag = 'output window, operand 0, single buffered']
    %7 = vsyncpa [#allocation3], 0
    %8 = vsyncpa [#allocation4], 0
    // Predicated region
    $region2: #{tpu_custom_call.1} parent=1 // pred_check
      _
    $region3: #{tpu_custom_call.1} parent=1 // pred_check_branch
      %10 = sbr.rel (0) target = $region5
    $region4: #{tpu_custom_call.1} parent=1 // pred_region
      %s12 = ssub.s32 256, 256
      %13 = vsyncadd [#allocation3], %s12
      %s14 = sshll.u32 [#allocation2], 4
      %s15 = int_to_ptr.vmem [resolvable:$true] %s14
      %20 = dma.hbm_to_vmem [thread:$0]  %s0, 256, %s15, [#allocation3], 128, 128, 8
    $region5: #{tpu_custom_call.1} parent=1 // pred_fallthru
      _
    // Predicated region
    $region6: #{tpu_custom_call.1} parent=1 // pred_check
      _
    $region7: #{tpu_custom_call.1} parent=1 // pred_check_branch
      %22 = sbr.rel (0) target = $region9
    $region8: #{tpu_custom_call.1} parent=1 // pred_region
      _
    $region9: #{tpu_custom_call.1} parent=1 // pred_fallthru
      _
    // Predicated region
    $region10: #{tpu_custom_call.1} parent=1 // pred_check
      _
    $region11: #{tpu_custom_call.1} parent=1 // pred_check_branch
      %24 = sbr.rel (0) target = $region13
    $region12: #{tpu_custom_call.1} parent=1 // pred_region
      %25 = dma.done [#allocation3], 256
    $region13: #{tpu_custom_call.1} parent=1 // pred_fallthru
      _
    %v26 = vld [vmem:[#allocation2] sm:$0xff]
    %v27 = vld [vmem:[#allocation2 + $0x8] sm:$0xff]
    %v28 = vmul.f32 %v26, %v26
    %v29 = vmul.f32 %v27, %v27
    %vm30 = vcmask 261120
    %v31 = vsel %vm30, %v28, 0.0
    %32 = vadd.xlane.f32.xlu0 %v31
    %v33 = vpop.xlane.xlu0 %32
    %v34 = vsel %vm30, %v29, 0.0
    %35 = vadd.xlane.f32.xlu0 %v34
    %v36 = vpop.xlane.xlu0 %35
    %v37 = vrcp.pop 32.0
    %v38 = vmul.f32 %v33, %v37
    %v39 = vmul.f32 %v36, %v37
    %v40 = vadd.f32 %v38, 1e-05
    %v41 = vadd.f32 %v39, 1e-05
    %v42 = vrsqrt.pop %v40
    %v43 = vrsqrt.pop %v41
    %v44 = vmul.f32 %v26, %v42
    %v45 = vmul.f32 %v27, %v43
    %v46 = vld [vmem:[%s1] sm:$0x1]
    %v48 = vlaneseq
    %v49 = vshrl.u32 %v48, 7
    %v50 = vsub.s32 0, %v49
    %v51 = vrot.slane %v46, %v50
    %v53 = vmul.f32 %v44, %v51
    %v54 = vmul.f32 %v45, %v51
    %v55 = vpack.c.bf16 %v54, %v53
    %v57 = vunpack.c.l.b16 %v55
    %v58 = vunpack.c.h.b16 %v55
    %v59 = vpack.c.b16 %v57, %v57
    %v60 = vpack.c.b16 %v58, %v58
    %vm63 = vcmask 257024
    %64 = vst.msk [vmem:[#allocation5] sm:$0xf] %vm63, %v59
    %65 = vst.msk [vmem:[#allocation5 + $0x4] sm:$0xf] %vm63, %v60
    // Predicated region
    $region14: #{tpu_custom_call.1} parent=1 // pred_check
      _
    $region15: #{tpu_custom_call.1} parent=1 // pred_check_branch
      %67 = sbr.rel (0) target = $region17
    $region16: #{tpu_custom_call.1} parent=1 // pred_region
      %s69 = ssub.s32 128, 128
      %70 = vsyncadd [#allocation4], %s69
      %s71 = sshll.u32 [#allocation5], 4
      %s72 = int_to_ptr.vmem [resolvable:$true] %s71
      %77 = dma.vmem_to_hbm [thread:$0]  %s72, 128, %s2, [#allocation4], 64, 64, 4
    $region17: #{tpu_custom_call.1} parent=1 // pred_fallthru
      _
    // Predicated region
    $region18: #{tpu_custom_call.1} parent=1 // pred_check
      _
    $region19: #{tpu_custom_call.1} parent=1 // pred_check_branch
      %79 = sbr.rel (0) target = $region21
    $region20: #{tpu_custom_call.1} parent=1 // pred_region
      %80 = dma.done [#allocation4], 128
    $region21: #{tpu_custom_call.1} parent=1 // pred_fallthru
      _
    %81 = vsyncpa [#allocation3], 1
    %82 = vsyncpa [#allocation4], 1

</llo_original>
